<compile_context>
chip_gen: v6e
topology: v6e:2x2x1
jax: 0.10.0
libtpu: 0.0.40
codegen_flags: <defaults>
</compile_context>

<pallas_src>
import functools

import jax
import jax.numpy as jnp
from jax import lax
from jax.experimental import pallas as pl
from jax.experimental.pallas import tpu as pltpu


def _cond_ln_kernel(x_ref, g_ref, b_ref, o_ref, *, eps):
    # x_ref : (tN, tL, D)   g_ref / b_ref : (tN, 1, D)   o_ref : (tN, tL, D)
    x = x_ref[...].astype(jnp.float32)
    mean = jnp.mean(x, axis=-1, keepdims=True)             # (tN, tL, 1)
    xc = x - mean
    var = jnp.mean(xc * xc, axis=-1, keepdims=True)        # (tN, tL, 1)
    inv_std = lax.rsqrt(var + eps)                         # EUP slot
    out = xc * inv_std * g_ref[...].astype(jnp.float32) + b_ref[...].astype(jnp.float32)
    o_ref[...] = out.astype(o_ref.dtype)


def _choose_tiles(N, L, D, dtype_bytes, target_block_bytes):
    """Pick (tN, tL) so one input block is ~target_block_bytes.
    Keeps D lane-dense (full extent), tL % 8 == 0 whenever tL < L, and
    4 * block (in+out, double-buffered) well under every generation's scoped
    VMEM default."""
    row_bytes = D * dtype_bytes
    batch_bytes = L * row_bytes
    if batch_bytes >= target_block_bytes:
        # Big sequences: tile along L inside one batch row.
        tl = (target_block_bytes // row_bytes) // 8 * 8
        tl = int(max(8, min(tl, L)))
        return 1, tl
    # Small sequences: pack whole batch rows per block (full-L extent, so no
    # sublane-divisibility constraint applies to L).
    tn = int(max(1, min(N, target_block_bytes // max(batch_bytes, 1))))
    return tn, L


def conditional_layer_norm(inputs, cond=None, gamma=None, beta=None,
                           w_gamma=None, w_beta=None, w_hidden=None,
                           *, epsilon=1e-12, tile_l=None, tile_n=None,
                           target_block_bytes=2 * 1024 * 1024):
    """Pallas TPU forward of ConditionalLayerNorm (center=True, scale=True).

    inputs  : (N, L, D)
    cond    : (N, Cd) or None (conditional=False)
    gamma, beta : (D,)
    w_gamma, w_beta : PyTorch Linear weights (out_features=D, in_features=Cd)
    w_hidden : optional hidden_dense weight (hidden_units, Cd); the PyTorch
               forward applies no activation to it, so folding here is exact.
    """
    N, L, D = inputs.shape
    assert gamma is not None and beta is not None
    assert gamma.shape == (D,) and beta.shape == (D,)

    # ---- per-batch affine params, computed ONCE in the wrapper (plain XLA) --
    # (review: the in-kernel M=1 matmul wasted MXU rows and was recomputed
    #  L//tL times; the extra 2*N*D HBM bytes are negligible vs N*L*D.)
    if cond is not None:
        if w_hidden is not None:
            # TODO(synk): only the linear hidden path (what forward() actually
            # computes — hidden_dense with no activation) is supported.
            cond = cond @ jnp.transpose(w_hidden)
        Cd = cond.shape[-1]
        assert cond.shape == (N, Cd)
        assert w_gamma is not None and w_beta is not None
        assert w_gamma.shape == (D, Cd) and w_beta.shape == (D, Cd)
        gamma_n = cond @ jnp.transpose(w_gamma) + gamma          # (N, D)
        beta_n = cond @ jnp.transpose(w_beta) + beta             # (N, D)
    else:
        gamma_n = jnp.broadcast_to(gamma, (N, D))
        beta_n = jnp.broadcast_to(beta, (N, D))
    gamma_n = gamma_n.astype(jnp.float32).reshape(N, 1, D)
    beta_n = beta_n.astype(jnp.float32).reshape(N, 1, D)

    # ---- tiling -------------------------------------------------------------
    dtype_bytes = jnp.dtype(inputs.dtype).itemsize
    auto_tn, auto_tl = _choose_tiles(N, L, D, dtype_bytes, target_block_bytes)
    tN = int(min(tile_n if tile_n is not None else auto_tn, N))
    tL = int(min(tile_l if tile_l is not None else auto_tl, L))
    if tL < L:
        sub = 8 if dtype_bytes >= 4 else (16 if dtype_bytes == 2 else 32)
        assert tL % sub == 0, f"tile_l must be a multiple of {sub} when < L"
    # cdiv grids: uneven tail blocks are handled by Pallas boundary masking,
    # and layernorm is row-independent so padded rows never affect valid rows.
    grid = (pl.cdiv(N, tN), pl.cdiv(L, tL))

    kernel = functools.partial(_cond_ln_kernel, eps=epsilon)

    out = pl.pallas_call(
        kernel,
        out_shape=jax.ShapeDtypeStruct((N, L, D), inputs.dtype),
        grid_spec=pltpu.PrefetchScalarGridSpec(
            num_scalar_prefetch=0,
            grid=grid,
            in_specs=[
                pl.BlockSpec((tN, tL, D), lambda n, l: (n, l, 0)),   # inputs tile
                pl.BlockSpec((tN, 1, D), lambda n, l: (n, 0, 0)),    # gamma_n rows
                pl.BlockSpec((tN, 1, D), lambda n, l: (n, 0, 0)),    # beta_n rows
            ],
            out_specs=pl.BlockSpec((tN, tL, D), lambda n, l: (n, l, 0)),
        ),
        compiler_params=pltpu.CompilerParams(
            dimension_semantics=("parallel", "parallel"),
        ),
    )(inputs, gamma_n, beta_n)
    return out


def conditional_layer_norm_ref(inputs, cond, gamma, beta, w_gamma, w_beta,
                               epsilon=1e-12):
    """Pure-JAX mirror of the PyTorch forward."""
    if cond is not None:
        cond_b = cond[:, None, :]                              # (N, 1, Cd)
        g = cond_b @ jnp.transpose(w_gamma) + gamma            # (N, 1, D)
        b = cond_b @ jnp.transpose(w_beta) + beta              # (N, 1, D)
    else:
        g, b = gamma, beta
    mean = jnp.mean(inputs, axis=-1, keepdims=True)
    out = inputs - mean
    var = jnp.mean(out ** 2, axis=-1, keepdims=True)
    std = (var + epsilon) ** 0.5
    return out / std * g + b


if __name__ == "__main__":
    key = jax.random.PRNGKey(0)
    keys = jax.random.split(key, 8)

    # Shapes consistent with the module: batch=4, seq=16, input_dim=128, cond_dim=64.
    N, L, D, Cd = 4, 16, 128, 64
    inputs = jax.random.normal(keys[0], (N, L, D), dtype=jnp.float32)
    cond = jax.random.normal(keys[1], (N, Cd), dtype=jnp.float32)
    gamma = jnp.ones((D,), jnp.float32) + 0.1 * jax.random.normal(keys[2], (D,), jnp.float32)
    beta = 0.1 * jax.random.normal(keys[3], (D,), jnp.float32)
    # PyTorch zero-inits beta_dense/gamma_dense; use small random weights so the
    # conditional path is numerically exercised.
    w_gamma = 0.05 * jax.random.normal(keys[4], (D, Cd), dtype=jnp.float32)
    w_beta = 0.05 * jax.random.normal(keys[5], (D, Cd), dtype=jnp.float32)

    # Test 1: conditional path, small shapes (batch-packed blocks, grid (1,1)).
    out = jax.block_until_ready(
        conditional_layer_norm(inputs, cond, gamma, beta, w_gamma, w_beta))
    ref = conditional_layer_norm_ref(inputs, cond, gamma, beta, w_gamma, w_beta)
    assert out.shape == (N, L, D)
    assert jnp.allclose(out, ref, atol=1e-4, rtol=1e-4), "conditional mismatch"

    # Test 2: conditional=False path (same kernel, broadcast base params).
    out_nc = jax.block_until_ready(
        conditional_layer_norm(inputs, None, gamma, beta))
    ref_nc = conditional_layer_norm_ref(inputs, None, gamma, beta, None, None)
    assert jnp.allclose(out_nc, ref_nc, atol=1e-4, rtol=1e-4), "non-conditional mismatch"

    # Test 3: L-tiling with an uneven tail block (cdiv grid + masked boundary).
    N2, L2 = 2, 520
    x2 = jax.random.normal(keys[6], (N2, L2, D), dtype=jnp.float32)
    c2 = jax.random.normal(keys[7], (N2, Cd), dtype=jnp.float32)
    out2 = jax.block_until_ready(
        conditional_layer_norm(x2, c2, gamma, beta, w_gamma, w_beta, tile_l=256))
    ref2 = conditional_layer_norm_ref(x2, c2, gamma, beta, w_gamma, w_beta)
    assert jnp.allclose(out2, ref2, atol=1e-4, rtol=1e-4), "tiled-L mismatch"

    print("KERNEL_OK")
</pallas_src>

<mosaic_0001>
module attributes {stable_mosaic.version = 11 : i64} {
  func.func @_cond_ln_kernel(%arg0: i32, %arg1: i32, %arg2: memref<4x16x128xf32, #tpu.memory_space<vmem>>, %arg3: memref<4x1x128xf32, #tpu.memory_space<vmem>>, %arg4: memref<4x1x128xf32, #tpu.memory_space<vmem>>, %arg5: memref<4x16x128xf32, #tpu.memory_space<vmem>>) attributes {dimension_semantics = [#tpu.dimension_semantics<parallel>, #tpu.dimension_semantics<parallel>], iteration_bounds = array<i64: 1, 1>, scalar_prefetch = 0 : i64, scratch_operands = 0 : i64, tpu.core_type = #tpu.core_type<tc>, window_params = [{transform_indices = @transform_0, window_bounds = array<i64: 4, 16, 128>}, {transform_indices = @transform_1, window_bounds = array<i64: 4, 1, 128>}, {transform_indices = @transform_2, window_bounds = array<i64: 4, 1, 128>}, {transform_indices = @transform_3, window_bounds = array<i64: 4, 16, 128>}]} {
    %c0 = arith.constant 0 : index
    %c0_0 = arith.constant 0 : index
    %c0_1 = arith.constant 0 : index
    %0 = vector.load %arg2[%c0, %c0_0, %c0_1] : memref<4x16x128xf32, #tpu.memory_space<vmem>>, vector<4x16x128xf32>
    %cst = arith.constant dense<0.000000e+00> : vector<4x16xf32>
    %1 = vector.multi_reduction <add>, %0, %cst [2] : vector<4x16x128xf32> to vector<4x16xf32>
    %2 = vector.shape_cast %1 : vector<4x16xf32> to vector<4x16x1xf32>
    %cst_2 = arith.constant 1.280000e+02 : f32
    %3 = vector.broadcast %cst_2 : f32 to vector<4x16x1xf32>
    %4 = arith.divf %2, %3 : vector<4x16x1xf32>
    %5 = vector.broadcast %4 : vector<4x16x1xf32> to vector<4x16x128xf32>
    %6 = arith.subf %0, %5 : vector<4x16x128xf32>
    %7 = arith.mulf %6, %6 : vector<4x16x128xf32>
    %cst_3 = arith.constant dense<0.000000e+00> : vector<4x16xf32>
    %8 = vector.multi_reduction <add>, %7, %cst_3 [2] : vector<4x16x128xf32> to vector<4x16xf32>
    %9 = vector.shape_cast %8 : vector<4x16xf32> to vector<4x16x1xf32>
    %cst_4 = arith.constant 1.280000e+02 : f32
    %10 = vector.broadcast %cst_4 : f32 to vector<4x16x1xf32>
    %11 = arith.divf %9, %10 : vector<4x16x1xf32>
    %cst_5 = arith.constant 9.99999996E-13 : f32
    %12 = vector.broadcast %cst_5 : f32 to vector<4x16x1xf32>
    %13 = arith.addf %11, %12 : vector<4x16x1xf32>
    %14 = math.rsqrt %13 : vector<4x16x1xf32>
    %15 = vector.broadcast %14 : vector<4x16x1xf32> to vector<4x16x128xf32>
    %16 = arith.mulf %6, %15 : vector<4x16x128xf32>
    %c0_6 = arith.constant 0 : index
    %c0_7 = arith.constant 0 : index
    %c0_8 = arith.constant 0 : index
    %17 = vector.load %arg3[%c0_6, %c0_7, %c0_8] : memref<4x1x128xf32, #tpu.memory_space<vmem>>, vector<4x1x128xf32>
    %18 = vector.broadcast %17 : vector<4x1x128xf32> to vector<4x16x128xf32>
    %19 = arith.mulf %16, %18 : vector<4x16x128xf32>
    %c0_9 = arith.constant 0 : index
    %c0_10 = arith.constant 0 : index
    %c0_11 = arith.constant 0 : index
    %20 = vector.load %arg4[%c0_9, %c0_10, %c0_11] : memref<4x1x128xf32, #tpu.memory_space<vmem>>, vector<4x1x128xf32>
    %21 = vector.broadcast %20 : vector<4x1x128xf32> to vector<4x16x128xf32>
    %22 = arith.addf %19, %21 : vector<4x16x128xf32>
    %c0_12 = arith.constant 0 : index
    %c0_13 = arith.constant 0 : index
    %c0_14 = arith.constant 0 : index
    %23 = vector.load %arg5[%c0_12, %c0_13, %c0_14] : memref<4x16x128xf32, #tpu.memory_space<vmem>>, vector<4x16x128xf32>
    tpu.vector_store %arg5[%c0_12, %c0_13, %c0_14], %22 {strides = array<i32>} : memref<4x16x128xf32, #tpu.memory_space<vmem>>, vector<4x16x128xf32>,
    return
  }
  func.func @transform_0(%arg0: i32, %arg1: i32) -> (i32, i32, i32) {
    %c0_i32 = arith.constant 0 : i32
    %c0_i32_0 = arith.constant 0 : i32
    return %arg0, %arg1, %c0_i32 : i32, i32, i32
  }
  func.func @transform_1(%arg0: i32, %arg1: i32) -> (i32, i32, i32) {
    %c0_i32 = arith.constant 0 : i32
    %c0_i32_0 = arith.constant 0 : i32
    %c0_i32_1 = arith.constant 0 : i32
    return %arg0, %c0_i32, %c0_i32_0 : i32, i32, i32
  }
  func.func @transform_2(%arg0: i32, %arg1: i32) -> (i32, i32, i32) {
    %c0_i32 = arith.constant 0 : i32
    %c0_i32_0 = arith.constant 0 : i32
    %c0_i32_1 = arith.constant 0 : i32
    return %arg0, %c0_i32, %c0_i32_0 : i32, i32, i32
  }
  func.func @transform_3(%arg0: i32, %arg1: i32) -> (i32, i32, i32) {
    %c0_i32 = arith.constant 0 : i32
    %c0_i32_0 = arith.constant 0 : i32
    return %arg0, %arg1, %c0_i32 : i32, i32, i32
  }
}

</mosaic_0001>

<llo_original>
// kernel: tpu_custom_call.1
$region0: #{tpu_custom_call.1}
  #allocation0 [shape = 'u32[]', space=smem, size = 0x4, offset = 0x4, fixed_abs, tag = 'smem constant byte address 0x4 - core index']
  #allocation1 [shape = 'u32[144,128]{1,0:T(1,128)}', space=vmem, size = 0x12000, scoped, tag = 'internal scratch']
  %s0 = inlined_call_operand.hbm [shape: f32[4,16,128], index: 0, kind: input, shape index: {}]
  %s1 = inlined_call_operand.hbm [shape: f32[4,1,128], index: 1, kind: input, shape index: {}]
  %s2 = inlined_call_operand.hbm [shape: f32[4,1,128], index: 2, kind: input, shape index: {}]
  %s3 = inlined_call_operand.hbm [shape: f32[4,16,128], index: 3, kind: output, shape index: {}]
  %s4 = sld [smem:[#allocation0]]
  $region34: #{tpu_custom_call.1} parent=0
    _
  %s6 = ssub.s32 1, %s4
  %s7 = scalar_select 0, %s6, %s4
  $region1: #{tpu_custom_call.1} parent=0
    #allocation2 [shape = 'u8[32768]{0}', space=vmem, size = 0x8000, scoped, tag = 'input window, operand 0, single buffered']
    #allocation3 [shape = 's32[1]{0}', space=sflag, size = 0x4, scoped, tag = 'scoped memory for tpu_custom_call.1']
    #allocation4 [shape = 's32[1]{0}', space=sflag, size = 0x4, scoped, tag = 'scoped memory for tpu_custom_call.1']
    #allocation5 [shape = 'u8[2048]{0}', space=vmem, size = 0x800, scoped, tag = 'input window, operand 1, single buffered']
    #allocation6 [shape = 's32[1]{0}', space=sflag, size = 0x4, scoped, tag = 'scoped memory for tpu_custom_call.1']
    #allocation7 [shape = 'u8[2048]{0}', space=vmem, size = 0x800, scoped, tag = 'input window, operand 2, single buffered']
    #allocation8 [shape = 'u8[32768]{0}', space=vmem, size = 0x8000, scoped, tag = 'output window, operand 0, single buffered']
    %8 = vsyncpa [#allocation3], 0
    %9 = vsyncpa [#allocation6], 0
    %10 = vsyncpa [#allocation4], 0
    // Predicated region
    $region2: #{tpu_custom_call.1} parent=1 // pred_check
      _
    $region3: #{tpu_custom_call.1} parent=1 // pred_check_branch
      %12 = sbr.rel (0) target = $region5
    $region4: #{tpu_custom_call.1} parent=1 // pred_region
      %s14 = ssub.s32 1024, 1024
      %15 = vsyncadd [#allocation3], %s14
      %s16 = sshll.u32 [#allocation2], 4
      %s17 = int_to_ptr.vmem [resolvable:$true] %s16
      %22 = dma.hbm_to_vmem [thread:$0]  %s0, 1024, %s17, [#allocation3], 128, 128, 8
    $region5: #{tpu_custom_call.1} parent=1 // pred_fallthru
      _
    // Predicated region
    $region6: #{tpu_custom_call.1} parent=1 // pred_check
      _
    $region7: #{tpu_custom_call.1} parent=1 // pred_check_branch
      %24 = sbr.rel (0) target = $region9
    $region8: #{tpu_custom_call.1} parent=1 // pred_region
      %s26 = ssub.s32 64, 64
      %27 = vsyncadd [#allocation6], %s26
      %s28 = sshll.u32 [#allocation5], 4
      %s29 = int_to_ptr.vmem [resolvable:$true] %s28
      %34 = dma.hbm_to_vmem [thread:$0]  %s1, 64, %s29, [#allocation6], 16, 16, 1
    $region9: #{tpu_custom_call.1} parent=1 // pred_fallthru
      _
    // Predicated region
    $region10: #{tpu_custom_call.1} parent=1 // pred_check
      _
    $region11: #{tpu_custom_call.1} parent=1 // pred_check_branch
      %36 = sbr.rel (0) target = $region13
    $region12: #{tpu_custom_call.1} parent=1 // pred_region
      %s38 = ssub.s32 64, 64
      %39 = vsyncadd [#allocation6], %s38
      %s40 = sshll.u32 [#allocation7], 4
      %s41 = int_to_ptr.vmem [resolvable:$true] %s40
      %46 = dma.hbm_to_vmem [thread:$0]  %s2, 64, %s41, [#allocation6], 16, 16, 1
    $region13: #{tpu_custom_call.1} parent=1 // pred_fallthru
      _
    // Predicated region
    $region14: #{tpu_custom_call.1} parent=1 // pred_check
      _
    $region15: #{tpu_custom_call.1} parent=1 // pred_check_branch
      %48 = sbr.rel (0) target = $region17
    $region16: #{tpu_custom_call.1} parent=1 // pred_region
      %49 = dma.done [#allocation3], 1024
    $region17: #{tpu_custom_call.1} parent=1 // pred_fallthru
      _
    // Predicated region
    $region18: #{tpu_custom_call.1} parent=1 // pred_check
      _
    $region19: #{tpu_custom_call.1} parent=1 // pred_check_branch
      %51 = sbr.rel (0) target = $region21
    $region20: #{tpu_custom_call.1} parent=1 // pred_region
      %52 = dma.done [#allocation6], 64
    $region21: #{tpu_custom_call.1} parent=1 // pred_fallthru
      _
    // Predicated region
    $region22: #{tpu_custom_call.1} parent=1 // pred_check
      _
    $region23: #{tpu_custom_call.1} parent=1 // pred_check_branch
      %54 = sbr.rel (0) target = $region25
    $region24: #{tpu_custom_call.1} parent=1 // pred_region
      %55 = dma.done [#allocation6], 64
    $region25: #{tpu_custom_call.1} parent=1 // pred_fallthru
      _
    %v56 = vld [vmem:[#allocation2] sm:$0xff]
    %v57 = vld [vmem:[#allocation2 + $0x8] sm:$0xff]
    %v58 = vld [vmem:[#allocation2 + $0x10] sm:$0xff]
    %v59 = vld [vmem:[#allocation2 + $0x18] sm:$0xff]
    %v60 = vld [vmem:[#allocation2 + $0x20] sm:$0xff]
    %v61 = vld [vmem:[#allocation2 + $0x28] sm:$0xff]
    %v62 = vld [vmem:[#allocation2 + $0x30] sm:$0xff]
    %v63 = vld [vmem:[#allocation2 + $0x38] sm:$0xff]
    %64 = vadd.xlane.f32.xlu0 %v56
    %v65 = vpop.xlane.xlu0 %64
    %66 = vadd.xlane.f32.xlu0 %v57
    %v67 = vpop.xlane.xlu0 %66
    %68 = vadd.xlane.f32.xlu0 %v58
    %v69 = vpop.xlane.xlu0 %68
    %70 = vadd.xlane.f32.xlu0 %v59
    %v71 = vpop.xlane.xlu0 %70
    %72 = vadd.xlane.f32.xlu0 %v60
    %v73 = vpop.xlane.xlu0 %72
    %74 = vadd.xlane.f32.xlu0 %v61
    %v75 = vpop.xlane.xlu0 %74
    %76 = vadd.xlane.f32.xlu0 %v62
    %v77 = vpop.xlane.xlu0 %76
    %78 = vadd.xlane.f32.xlu0 %v63
    %v79 = vpop.xlane.xlu0 %78
    %v80 = vrcp.pop 128.0
    %v81 = vmul.f32 %v65, %v80
    %v82 = vmul.f32 %v67, %v80
    %v83 = vmul.f32 %v69, %v80
    %v84 = vmul.f32 %v71, %v80
    %v85 = vmul.f32 %v73, %v80
    %v86 = vmul.f32 %v75, %v80
    %v87 = vmul.f32 %v77, %v80
    %v88 = vmul.f32 %v79, %v80
    %v89 = vsub.f32 %v56, %v81
    %v90 = vsub.f32 %v57, %v82
    %v91 = vsub.f32 %v58, %v83
    %v92 = vsub.f32 %v59, %v84
    %v93 = vsub.f32 %v60, %v85
    %v94 = vsub.f32 %v61, %v86
    %v95 = vsub.f32 %v62, %v87
    %v96 = vsub.f32 %v63, %v88
    %v97 = vmul.f32 %v89, %v89
    %v98 = vmul.f32 %v90, %v90
    %v99 = vmul.f32 %v91, %v91
    %v100 = vmul.f32 %v92, %v92
    %v101 = vmul.f32 %v93, %v93
    %v102 = vmul.f32 %v94, %v94
    %v103 = vmul.f32 %v95, %v95
    %v104 = vmul.f32 %v96, %v96
    %105 = vadd.xlane.f32.xlu0 %v97
    %v106 = vpop.xlane.xlu0 %105
    %107 = vadd.xlane.f32.xlu0 %v98
    %v108 = vpop.xlane.xlu0 %107
    %109 = vadd.xlane.f32.xlu0 %v99
    %v110 = vpop.xlane.xlu0 %109
    %111 = vadd.xlane.f32.xlu0 %v100
    %v112 = vpop.xlane.xlu0 %111
    %113 = vadd.xlane.f32.xlu0 %v101
    %v114 = vpop.xlane.xlu0 %113
    %115 = vadd.xlane.f32.xlu0 %v102
    %v116 = vpop.xlane.xlu0 %115
    %117 = vadd.xlane.f32.xlu0 %v103
    %v118 = vpop.xlane.xlu0 %117
    %119 = vadd.xlane.f32.xlu0 %v104
    %v120 = vpop.xlane.xlu0 %119
    %v121 = vmul.f32 %v106, %v80
    %v122 = vmul.f32 %v108, %v80
    %v123 = vmul.f32 %v110, %v80
    %v124 = vmul.f32 %v112, %v80
    %v125 = vmul.f32 %v114, %v80
    %v126 = vmul.f32 %v116, %v80
    %v127 = vmul.f32 %v118, %v80
    %v128 = vmul.f32 %v120, %v80
    %v129 = vadd.f32 %v121, 1e-12
    %v130 = vadd.f32 %v122, 1e-12
    %v131 = vadd.f32 %v123, 1e-12
    %v132 = vadd.f32 %v124, 1e-12
    %v133 = vadd.f32 %v125, 1e-12
    %v134 = vadd.f32 %v126, 1e-12
    %v135 = vadd.f32 %v127, 1e-12
    %v136 = vadd.f32 %v128, 1e-12
    %v137 = vrsqrt.pop %v129
    %v138 = vrsqrt.pop %v130
    %v139 = vrsqrt.pop %v131
    %v140 = vrsqrt.pop %v132
    %v141 = vrsqrt.pop %v133
    %v142 = vrsqrt.pop %v134
    %v143 = vrsqrt.pop %v135
    %v144 = vrsqrt.pop %v136
    %v145 = vmul.f32 %v89, %v137
    %v146 = vmul.f32 %v90, %v138
    %v147 = vmul.f32 %v91, %v139
    %v148 = vmul.f32 %v92, %v140
    %v149 = vmul.f32 %v93, %v141
    %v150 = vmul.f32 %v94, %v142
    %v151 = vmul.f32 %v95, %v143
    %v152 = vmul.f32 %v96, %v144
    %v153 = vld [vmem:[#allocation5] sm:$0x1]
    %v154 = vld [vmem:[#allocation5 + $0x1] sm:$0x1]
    %v155 = vld [vmem:[#allocation5 + $0x2] sm:$0x1]
    %v156 = vld [vmem:[#allocation5 + $0x3] sm:$0x1]
    %v161 = vlaneseq
    %v162 = vshrl.u32 %v161, 7
    %v163 = vsub.s32 0, %v162
    %v164 = vrot.slane %v153, %v163
    %v165 = vlaneseq
    %v166 = vshrl.u32 %v165, 7
    %v167 = vsub.s32 0, %v166
    %v168 = vrot.slane %v154, %v167
    %v169 = vlaneseq
    %v170 = vshrl.u32 %v169, 7
    %v171 = vsub.s32 0, %v170
    %v172 = vrot.slane %v155, %v171
    %v173 = vlaneseq
    %v174 = vshrl.u32 %v173, 7
    %v175 = vsub.s32 0, %v174
    %v176 = vrot.slane %v156, %v175
    %v181 = vmul.f32 %v145, %v164
    %v182 = vmul.f32 %v146, %v164
    %v183 = vmul.f32 %v147, %v168
    %v184 = vmul.f32 %v148, %v168
    %v185 = vmul.f32 %v149, %v172
    %v186 = vmul.f32 %v150, %v172
    %v187 = vmul.f32 %v151, %v176
    %v188 = vmul.f32 %v152, %v176
    %v189 = vld [vmem:[#allocation7] sm:$0x1]
    %v190 = vld [vmem:[#allocation7 + $0x1] sm:$0x1]
    %v191 = vld [vmem:[#allocation7 + $0x2] sm:$0x1]
    %v192 = vld [vmem:[#allocation7 + $0x3] sm:$0x1]
    %v197 = vlaneseq
    %v198 = vshrl.u32 %v197, 7
    %v199 = vsub.s32 0, %v198
    %v200 = vrot.slane %v189, %v199
    %v201 = vlaneseq
    %v202 = vshrl.u32 %v201, 7
    %v203 = vsub.s32 0, %v202
    %v204 = vrot.slane %v190, %v203
    %v205 = vlaneseq
    %v206 = vshrl.u32 %v205, 7
    %v207 = vsub.s32 0, %v206
    %v208 = vrot.slane %v191, %v207
    %v209 = vlaneseq
    %v210 = vshrl.u32 %v209, 7
    %v211 = vsub.s32 0, %v210
    %v212 = vrot.slane %v192, %v211
    %v217 = vadd.f32 %v181, %v200
    %v218 = vadd.f32 %v182, %v200
    %v219 = vadd.f32 %v183, %v204
    %v220 = vadd.f32 %v184, %v204
    %v221 = vadd.f32 %v185, %v208
    %v222 = vadd.f32 %v186, %v208
    %v223 = vadd.f32 %v187, %v212
    %v224 = vadd.f32 %v188, %v212
    %225 = vst [vmem:[#allocation8] sm:$0xff] %v217
    %226 = vst [vmem:[#allocation8 + $0x8] sm:$0xff] %v218
    %227 = vst [vmem:[#allocation8 + $0x10] sm:$0xff] %v219
    %228 = vst [vmem:[#allocation8 + $0x18] sm:$0xff] %v220
    %229 = vst [vmem:[#allocation8 + $0x20] sm:$0xff] %v221
    %230 = vst [vmem:[#allocation8 + $0x28] sm:$0xff] %v222
    %231 = vst [vmem:[#allocation8 + $0x30] sm:$0xff] %v223
    %232 = vst [vmem:[#allocation8 + $0x38] sm:$0xff] %v224
    // Predicated region
    $region26: #{tpu_custom_call.1} parent=1 // pred_check
      _
    $region27: #{tpu_custom_call.1} parent=1 // pred_check_branch
      %234 = sbr.rel (0) target = $region29
    $region28: #{tpu_custom_call.1} parent=1 // pred_region
      %s236 = ssub.s32 1024, 1024
      %237 = vsyncadd [#allocation4], %s236
      %s238 = sshll.u32 [#allocation8], 4
      %s239 = int_to_ptr.vmem [resolvable:$true] %s238
      %244 = dma.vmem_to_hbm [thread:$0]  %s239, 1024, %s3, [#allocation4], 128, 128, 8
    $region29: #{tpu_custom_call.1} parent=1 // pred_fallthru
      _
    // Predicated region
    $region30: #{tpu_custom_call.1} parent=1 // pred_check
      _
    $region31: #{tpu_custom_call.1} parent=1 // pred_check_branch
      %246 = sbr.rel (0) target = $region33
    $region32: #{tpu_custom_call.1} parent=1 // pred_region
      %247 = dma.done [#allocation4], 1024
    $region33: #{tpu_custom_call.1} parent=1 // pred_fallthru
      _
    %248 = vsyncpa [#allocation3], 1
    %249 = vsyncpa [#allocation6], 1
    %250 = vsyncpa [#allocation4], 1

</llo_original>
